<compile_context>
chip_gen: v7x
topology: tpu7x:2x2x1
jax: 0.10.0
libtpu: 0.0.40
codegen_flags: <defaults>
</compile_context>

<pallas_src>
import jax
import jax.numpy as jnp
from jax.experimental import pallas as pl
from jax.experimental.pallas import tpu as pltpu


# -----------------------------------------------------------------------------
# Kernels (whole BaseBlock in one body; BN pre-folded, weights bf16)
# -----------------------------------------------------------------------------
def _base_block_proj_kernel(x_ref, w1r_ref, b1r_ref, w2_ref, b2_ref, o_ref):
    """out = relu(relu(x@W1+b1) @ W2 + b2) + relu(x@Wr+br).

    W1 and Wr are pre-concatenated along columns -> one MXU pass over x."""
    d_out = o_ref.shape[1]
    x = x_ref[...].astype(w1r_ref.dtype)                      # bf16 for the MXU
    hr = jnp.dot(x, w1r_ref[...], preferred_element_type=jnp.float32)
    hr = jnp.maximum(hr + b1r_ref[...], 0.0)                   # (tile_n, 2*d_out)
    h = hr[:, :d_out]                                          # block path
    r = hr[:, d_out:]                                          # residual path
    y = jnp.dot(h.astype(w2_ref.dtype), w2_ref[...],
                preferred_element_type=jnp.float32)
    o_ref[...] = (jnp.maximum(y + b2_ref[...], 0.0) + r).astype(o_ref.dtype)


def _base_block_id_kernel(x_ref, w1_ref, b1_ref, w2_ref, b2_ref, o_ref):
    """out = relu(relu(x@W1+b1) @ W2 + b2) + x  (identity residual)."""
    x = x_ref[...]
    h = jnp.dot(x.astype(w1_ref.dtype), w1_ref[...],
                preferred_element_type=jnp.float32)
    h = jnp.maximum(h + b1_ref[...], 0.0)
    y = jnp.dot(h.astype(w2_ref.dtype), w2_ref[...],
                preferred_element_type=jnp.float32)
    o_ref[...] = (jnp.maximum(y + b2_ref[...], 0.0)
                  + x.astype(jnp.float32)).astype(o_ref.dtype)


# -----------------------------------------------------------------------------
# One-time parameter preparation: transpose weights, fold BatchNorm, cast bf16
# -----------------------------------------------------------------------------
def _fold_linear_bn(w, b, gamma, beta, mean, var, eps=1e-5):
    """nn.Linear (w:(d_out,d_in), b) followed by eval-mode BatchNorm1d ->
    (w_f:(d_in,d_out), b_f:(1,d_out)) such that y = x @ w_f + b_f."""
    scale = gamma / jnp.sqrt(var + eps)          # (d_out,)
    shift = beta - mean * scale                  # (d_out,)
    w_f = w.T * scale[None, :]                   # (d_in, d_out)
    b_f = (b * scale + shift).reshape(1, -1)     # (1, d_out)
    return w_f, b_f


def prepare_params(params, eps=1e-5, weight_dtype=jnp.bfloat16):
    """Fold BN into the linears (in f32), pre-transpose, concat W1||Wr for the
    projection case, and cast weights to bf16 (biases stay f32). Do this ONCE."""
    w1, b1 = _fold_linear_bn(
        params["w1"], params["b1"], params["bn1_gamma"], params["bn1_beta"],
        params["bn1_mean"], params["bn1_var"], eps)
    w2, b2 = _fold_linear_bn(
        params["w2"], params["b2"], params["bn2_gamma"], params["bn2_beta"],
        params["bn2_mean"], params["bn2_var"], eps)
    prep = {}
    if "wr" in params:
        wr, br = _fold_linear_bn(
            params["wr"], params["br"], params["bnr_gamma"], params["bnr_beta"],
            params["bnr_mean"], params["bnr_var"], eps)
        prep["w1r"] = jnp.concatenate([w1, wr], axis=1).astype(weight_dtype)
        prep["b1r"] = jnp.concatenate([b1, br], axis=1).astype(jnp.float32)
    else:
        prep["w1r"] = w1.astype(weight_dtype)
        prep["b1r"] = b1.astype(jnp.float32)
    prep["w2"] = w2.astype(weight_dtype)
    prep["b2"] = b2.astype(jnp.float32)
    return prep


# -----------------------------------------------------------------------------
# Wrapper
# -----------------------------------------------------------------------------
def _round_up(x, m):
    return ((x + m - 1) // m) * m


def _vmem_cap_bytes():
    try:
        return int(pltpu.get_tpu_info().vmem_capacity_bytes)
    except Exception:
        return 64 * 1024 * 1024          # conservative (v7x per-TC size)


def _vmem_limit_bytes(tile_n, d_in, w1_cols, d_out, x_itemsize, w_itemsize):
    # Resident weights/biases are single-buffered (pl.Buffered(1)).
    weights = (d_in * w1_cols + d_out * d_out) * w_itemsize
    biases = (w1_cols + d_out) * 4
    # Streamed x / output tiles are double-buffered by the pipeline.
    io_blocks = 2 * tile_n * (d_in + d_out) * x_itemsize
    # f32 intermediates (hr, y) plus bf16 copy of the x tile.
    inter = tile_n * (w1_cols + d_out) * 4 + tile_n * d_in * 2
    need = weights + biases + io_blocks + inter
    need = int(need * 1.5) + (2 << 20)           # compiler/layout slack
    cap = int(0.8 * _vmem_cap_bytes())           # leave headroom for Mosaic
    return int(min(cap, max(need, 32 << 20)))


def _pick_tile_n(n):
    """>=2 grid steps (both v7x cores busy), sublane-friendly rows, <=512."""
    if n <= 8:
        return 8
    tile_n = min(512, _round_up(pl.cdiv(n, 2), 16))
    return max(8, min(tile_n, _round_up(n, 8)))


def base_block_forward(x, prep, *, tile_n=None):
    """Pallas implementation of BaseBlock.forward (eval mode).

    x:    (N, d_in) float32
    prep: output of prepare_params() (BN-folded, transposed, bf16 weights).
    """
    n, d_in = x.shape
    d_out = prep["w2"].shape[1]
    w1_cols = prep["w1r"].shape[1]
    has_proj = (w1_cols == 2 * d_out)
    if not has_proj:
        assert d_in == d_out, "identity residual requires d_in == d_out"

    if tile_n is None:
        tile_n = _pick_tile_n(n)
    tile_n = max(8, _round_up(tile_n, 8))
    grid = (pl.cdiv(n, tile_n),)

    def row_spec(width):
        return pl.BlockSpec((tile_n, width), lambda i: (i, 0))

    def resident_spec(shape):
        # Constant index_map -> single-buffer (no wasted VMEM on double-buffer).
        return pl.BlockSpec(shape, lambda i: (0, 0),
                            pipeline_mode=pl.Buffered(1))

    in_specs = [
        row_spec(d_in),                        # x tile (streamed)
        resident_spec((d_in, w1_cols)),        # W1 (|| Wr), bf16, BN-folded
        resident_spec((1, w1_cols)),           # b1 (|| br), f32
        resident_spec((d_out, d_out)),         # W2, bf16, BN-folded
        resident_spec((1, d_out)),             # b2, f32
    ]
    args = [x, prep["w1r"], prep["b1r"], prep["w2"], prep["b2"]]
    kernel = _base_block_proj_kernel if has_proj else _base_block_id_kernel

    x_itemsize = jnp.dtype(x.dtype).itemsize
    w_itemsize = jnp.dtype(prep["w1r"].dtype).itemsize
    vmem_limit = _vmem_limit_bytes(tile_n, d_in, w1_cols, d_out,
                                   x_itemsize, w_itemsize)

    flops = 2 * n * d_in * w1_cols + 2 * n * d_out * d_out
    bytes_accessed = (n * (d_in + d_out) * x_itemsize
                      + (d_in * w1_cols + d_out * d_out) * w_itemsize
                      + (w1_cols + d_out) * 4)

    return pl.pallas_call(
        kernel,
        out_shape=jax.ShapeDtypeStruct((n, d_out), x.dtype),
        grid_spec=pltpu.PrefetchScalarGridSpec(
            num_scalar_prefetch=0,
            grid=grid,
            in_specs=in_specs,
            out_specs=row_spec(d_out),
        ),
        compiler_params=pltpu.CompilerParams(
            dimension_semantics=("parallel",),
            vmem_limit_bytes=vmem_limit),
        cost_estimate=pl.CostEstimate(flops=flops, transcendentals=0,
                                      bytes_accessed=bytes_accessed),
    )(*args)


# -----------------------------------------------------------------------------
# Deterministic parameter init + pure-JAX reference
# -----------------------------------------------------------------------------
def init_params(key, d_in, d_out):
    ks = jax.random.split(key, 14)
    u = lambda k, shape, s=0.1: jax.random.uniform(k, shape, jnp.float32, -s, s)
    p = {
        "w1": u(ks[0], (d_out, d_in)), "b1": u(ks[1], (d_out,)),
        "bn1_gamma": 1.0 + u(ks[2], (d_out,)), "bn1_beta": u(ks[3], (d_out,)),
        "bn1_mean": u(ks[4], (d_out,)), "bn1_var": 1.0 + u(ks[5], (d_out,)) ** 2,

        "w2": u(ks[6], (d_out, d_out)), "b2": u(ks[7], (d_out,)),
        "bn2_gamma": 1.0 + u(ks[8], (d_out,)), "bn2_beta": u(ks[9], (d_out,)),
        "bn2_mean": u(ks[10], (d_out,)), "bn2_var": 1.0 + u(ks[11], (d_out,)) ** 2,
    }
    if d_in != d_out:
        p.update({
            "wr": u(ks[12], (d_out, d_in)), "br": u(ks[13], (d_out,)),
            "bnr_gamma": jnp.ones((d_out,), jnp.float32),
            "bnr_beta": jnp.zeros((d_out,), jnp.float32),
            "bnr_mean": jnp.zeros((d_out,), jnp.float32),
            "bnr_var": jnp.ones((d_out,), jnp.float32),
        })
    return p


def reference_forward(x, params):
    """Pure-JAX reference (eval-mode BaseBlock) for correctness check."""
    def lbr(x, w, b, g, be, m, v, eps=1e-5):
        y = x @ w.T + b
        y = (y - m) / jnp.sqrt(v + eps) * g + be
        return jnp.maximum(y, 0.0)

    d_in, d_out = x.shape[1], params["w1"].shape[0]
    res = x if d_in == d_out else lbr(x, params["wr"], params["br"],
                                      params["bnr_gamma"], params["bnr_beta"],
                                      params["bnr_mean"], params["bnr_var"])
    h = lbr(x, params["w1"], params["b1"], params["bn1_gamma"],
            params["bn1_beta"], params["bn1_mean"], params["bn1_var"])
    h = lbr(h, params["w2"], params["b2"], params["bn2_gamma"],
            params["bn2_beta"], params["bn2_mean"], params["bn2_var"])
    return res + h


if __name__ == "__main__":
    key = jax.random.PRNGKey(0)

    # Two small cases: projection residual (d_in != d_out) and identity
    # residual (d_in == d_out). d_out is a multiple of 128 -> lane-dense
    # stores; N=32 -> a 2-step "parallel" row grid (both v7x cores busy).
    for (N, D_IN, D_OUT) in [(32, 64, 128), (32, 128, 128)]:
        key, k_x, k_p = jax.random.split(key, 3)
        x = jax.random.normal(k_x, (N, D_IN), jnp.float32)
        raw_params = init_params(k_p, D_IN, D_OUT)
        prep = prepare_params(raw_params)   # one-time BN fold + transpose + bf16

        out = base_block_forward(x, prep)
        out = jax.block_until_ready(out)

        ref = reference_forward(x, raw_params)
        assert out.shape == (N, D_OUT)
        # bf16 weights -> looser tolerance than the pure-f32 version.
        assert jnp.allclose(out, ref, atol=3e-2, rtol=3e-2), \
            f"mismatch vs reference for shape {(N, D_IN, D_OUT)}"

    print("KERNEL_OK")
</pallas_src>

<mosaic_0001>
module attributes {stable_mosaic.version = 11 : i64} {
  func.func @_base_block_proj_kernel(%arg0: i32, %arg1: memref<16x64xf32, #tpu.memory_space<vmem>>, %arg2: memref<64x256xbf16, #tpu.memory_space<vmem>>, %arg3: memref<1x256xf32, #tpu.memory_space<vmem>>, %arg4: memref<128x128xbf16, #tpu.memory_space<vmem>>, %arg5: memref<1x128xf32, #tpu.memory_space<vmem>>, %arg6: memref<16x128xf32, #tpu.memory_space<vmem>>) attributes {dimension_semantics = [#tpu.dimension_semantics<parallel>], iteration_bounds = array<i64: 2>, scalar_prefetch = 0 : i64, scratch_operands = 0 : i64, tpu.core_type = #tpu.core_type<tc>, window_params = [{transform_indices = @transform_0, window_bounds = array<i64: 16, 64>}, {pipeline_mode = #tpu.pipeline_mode<synchronous>, transform_indices = @transform_1, window_bounds = array<i64: 64, 256>}, {pipeline_mode = #tpu.pipeline_mode<synchronous>, transform_indices = @transform_2, window_bounds = array<i64: 1, 256>}, {pipeline_mode = #tpu.pipeline_mode<synchronous>, transform_indices = @transform_3, window_bounds = array<i64: 128, 128>}, {pipeline_mode = #tpu.pipeline_mode<synchronous>, transform_indices = @transform_4, window_bounds = array<i64: 1, 128>}, {transform_indices = @transform_5, window_bounds = array<i64: 16, 128>}]} {
    %c0 = arith.constant 0 : index
    %c0_0 = arith.constant 0 : index
    %0 = vector.load %arg1[%c0, %c0_0] : memref<16x64xf32, #tpu.memory_space<vmem>>, vector<16x64xf32>
    %1 = arith.truncf %0 : vector<16x64xf32> to vector<16x64xbf16>
    %c0_1 = arith.constant 0 : index
    %c0_2 = arith.constant 0 : index
    %2 = vector.load %arg2[%c0_1, %c0_2] : memref<64x256xbf16, #tpu.memory_space<vmem>>, vector<64x256xbf16>
    %cst = arith.constant dense<0.000000e+00> : vector<16x256xf32>
    %3 = tpu.matmul %1, %2, %cst {dimension_numbers = #tpu.dot_dimension_numbers<[1], [0], [0], [1], [0, 0, 1, 1], [], []>} : vector<16x64xbf16>, vector<64x256xbf16>, vector<16x256xf32> -> vector<16x256xf32>
    %c0_3 = arith.constant 0 : index
    %c0_4 = arith.constant 0 : index
    %4 = vector.load %arg3[%c0_3, %c0_4] : memref<1x256xf32, #tpu.memory_space<vmem>>, vector<1x256xf32>
    %5 = vector.broadcast %4 : vector<1x256xf32> to vector<16x256xf32>
    %6 = arith.addf %3, %5 : vector<16x256xf32>
    %cst_5 = arith.constant 0.000000e+00 : f32
    %7 = vector.broadcast %cst_5 : f32 to vector<16x256xf32>
    %8 = arith.maximumf %6, %7 : vector<16x256xf32>
    %9 = vector.extract_strided_slice %8 {offsets = [0, 0], sizes = [16, 128], strides = [1, 1]} : vector<16x256xf32> to vector<16x128xf32>
    %10 = vector.extract_strided_slice %8 {offsets = [0, 128], sizes = [16, 128], strides = [1, 1]} : vector<16x256xf32> to vector<16x128xf32>
    %11 = arith.truncf %9 : vector<16x128xf32> to vector<16x128xbf16>
    %c0_6 = arith.constant 0 : index
    %c0_7 = arith.constant 0 : index
    %12 = vector.load %arg4[%c0_6, %c0_7] : memref<128x128xbf16, #tpu.memory_space<vmem>>, vector<128x128xbf16>
    %cst_8 = arith.constant dense<0.000000e+00> : vector<16x128xf32>
    %13 = tpu.matmul %11, %12, %cst_8 {dimension_numbers = #tpu.dot_dimension_numbers<[1], [0], [0], [1], [0, 0, 1, 1], [], []>} : vector<16x128xbf16>, vector<128x128xbf16>, vector<16x128xf32> -> vector<16x128xf32>
    %c0_9 = arith.constant 0 : index
    %c0_10 = arith.constant 0 : index
    %14 = vector.load %arg5[%c0_9, %c0_10] : memref<1x128xf32, #tpu.memory_space<vmem>>, vector<1x128xf32>
    %15 = vector.broadcast %14 : vector<1x128xf32> to vector<16x128xf32>
    %16 = arith.addf %13, %15 : vector<16x128xf32>
    %cst_11 = arith.constant 0.000000e+00 : f32
    %17 = vector.broadcast %cst_11 : f32 to vector<16x128xf32>
    %18 = arith.maximumf %16, %17 : vector<16x128xf32>
    %19 = arith.addf %18, %10 : vector<16x128xf32>
    %c0_12 = arith.constant 0 : index
    %c0_13 = arith.constant 0 : index
    %20 = vector.load %arg6[%c0_12, %c0_13] : memref<16x128xf32, #tpu.memory_space<vmem>>, vector<16x128xf32>
    tpu.vector_store %arg6[%c0_12, %c0_13], %19 {strides = array<i32>} : memref<16x128xf32, #tpu.memory_space<vmem>>, vector<16x128xf32>,
    return
  }
  func.func @transform_0(%arg0: i32) -> (i32, i32) {
    %c0_i32 = arith.constant 0 : i32
    %c0_i32_0 = arith.constant 0 : i32
    return %arg0, %c0_i32 : i32, i32
  }
  func.func @transform_1(%arg0: i32) -> (i32, i32) {
    %c0_i32 = arith.constant 0 : i32
    %c0_i32_0 = arith.constant 0 : i32
    %c0_i32_1 = arith.constant 0 : i32
    return %c0_i32, %c0_i32_0 : i32, i32
  }
  func.func @transform_2(%arg0: i32) -> (i32, i32) {
    %c0_i32 = arith.constant 0 : i32
    %c0_i32_0 = arith.constant 0 : i32
    %c0_i32_1 = arith.constant 0 : i32
    return %c0_i32, %c0_i32_0 : i32, i32
  }
  func.func @transform_3(%arg0: i32) -> (i32, i32) {
    %c0_i32 = arith.constant 0 : i32
    %c0_i32_0 = arith.constant 0 : i32
    %c0_i32_1 = arith.constant 0 : i32
    return %c0_i32, %c0_i32_0 : i32, i32
  }
  func.func @transform_4(%arg0: i32) -> (i32, i32) {
    %c0_i32 = arith.constant 0 : i32
    %c0_i32_0 = arith.constant 0 : i32
    %c0_i32_1 = arith.constant 0 : i32
    return %c0_i32, %c0_i32_0 : i32, i32
  }
  func.func @transform_5(%arg0: i32) -> (i32, i32) {
    %c0_i32 = arith.constant 0 : i32
    %c0_i32_0 = arith.constant 0 : i32
    return %arg0, %c0_i32 : i32, i32
  }
}

</mosaic_0001>

<llo_original>
// kernel: tpu_custom_call.1
$region0: #{tpu_custom_call.1}
  #allocation0 [shape = 'u32[]', space=smem, size = 0x4, offset = 0x4, fixed_abs, tag = 'smem constant byte address 0x4 - core index']
  #allocation1 [shape = 'u32[144,128]{1,0:T(1,128)}', space=vmem, size = 0x12000, scoped, tag = 'internal scratch']
  %s0 = inlined_call_operand.hbm [shape: f32[32,64], index: 0, kind: input, shape index: {}]
  %s1 = inlined_call_operand.hbm [shape: bf16[64,256], index: 1, kind: input, shape index: {}]
  %s2 = inlined_call_operand.vmem [shape: f32[1,256], index: 2, kind: input, shape index: {}]
  %s3 = inlined_call_operand.hbm [shape: bf16[128,128], index: 3, kind: input, shape index: {}]
  %s4 = inlined_call_operand.vmem [shape: f32[1,128], index: 4, kind: input, shape index: {}]
  %s5 = inlined_call_operand.hbm [shape: f32[32,128], index: 5, kind: output, shape index: {}]
  %s6 = sld [smem:[#allocation0]]
  $region65: #{tpu_custom_call.1} parent=0
    _
  %s8 = ssub.s32 1, %s6
  %s9 = scalar_select 0, %s8, %s6
  $region1: #{tpu_custom_call.1} parent=0
    #allocation2 [shape = 'u8[16384]{0}', space=vmem, size = 0x4000, scoped, tag = 'input window, operand 0']
    #allocation3 [shape = 's32[2]{0}', space=sflag, size = 0x8, scoped, tag = 'scoped memory for tpu_custom_call.1']
    #allocation4 [shape = 's32[2]{0}', space=sflag, size = 0x8, scoped, tag = 'scoped memory for tpu_custom_call.1']
    #allocation5 [shape = 'u8[32768]{0}', space=vmem, size = 0x8000, scoped, tag = 'input window, operand 1, single buffered']
    #allocation6 [shape = 's32[1]{0}', space=sflag, size = 0x4, scoped, tag = 'scoped memory for tpu_custom_call.1']
    #allocation7 [shape = 'u8[32768]{0}', space=vmem, size = 0x8000, scoped, tag = 'input window, operand 3, single buffered']
    #allocation8 [shape = 'u8[16384]{0}', space=vmem, size = 0x4000, scoped, tag = 'output window, operand 0']
    %10 = vsyncpa [#allocation3], 0
    %s11 = scalar_lea.sflag [#allocation3], 1
    %12 = vsyncpa %s11, 0
    %13 = vsyncpa [#allocation6], 0
    %14 = vsyncpa [#allocation4], 0
    %s15 = scalar_lea.sflag [#allocation4], 1
    %16 = vsyncpa %s15, 0
    loop: start=0, step=1, limit=4
    $region2: #{tpu_custom_call.1} parent=1 // loop_pre_header
      _
    $region3: #{tpu_custom_call.1} parent=1 // loop_header
      %s18 = sphi 0, %s22
      %p19 = scmp.ge.s32.totalorder %s18, 4
      %s28 = sphi 0, %s30
      %s31 = sphi 0, %s28
      %s32 = sphi 0, %s31
      %s48 = sphi 0, %s32
      %s52 = sphi 0, %s52
      %s54 = sphi 0, %s52
      %s55 = sphi 0, %s54
      %s69 = sphi 0, %s55
      %s73 = sphi 0, %s73
      %s75 = sphi 0, %s73
      %s76 = sphi 0, %s75
      %s90 = sphi 0, %s76
      %s94 = sphi 0, %s94
      %s96 = sphi 0, %s94
      %s97 = sphi 0, %s96
      %s111 = sphi 0, %s97
      %s115 = sphi 0, %s115
      %s117 = sphi 0, %s115
      %s118 = sphi 0, %s117
      %s132 = sphi 0, %s118
      %s138 = sphi 0, %s140
      %s141 = sphi 0, %s138
      %s142 = sphi 0, %s141
      %s158 = sphi 0, %s142
    $region4: #{tpu_custom_call.1} parent=1 // loop_header_branch
      %21 = sbr.rel (%p19) target = $region8
    $region5: #{tpu_custom_call.1} parent=1 // loop_body
      %s23 = ssub.s32 %s18, 1
      %s24 = ssub.s32 %s18, 2
      %s25 = sadd.s32 %s18, 1
      %s26 = ssub.s32 %s18, %s25
      %p27 = scmp.eq.s32.totalorder %s26, 0
      %s29 = sadd.s32 %s28, 1
      %s30 = scalar_select %p27, %s28, %s29
      %p33 = pneg %p27
      %p34 = scmp.eq.s32.totalorder %s18, 1
      %p35 = por %p33, %p34
      %p36 = scmp.ne.s32.totalorder %s28, %s31
      %p37 = scmp.eq.s32.totalorder %s18, 0
      %p38 = por %p36, %p37
      %p39 = scmp.ne.s32.totalorder %s28, %s31
      %p40 = scmp.eq.s32.totalorder %s23, 1
      %p41 = por %p39, %p40
      %p42 = scmp.ne.s32.totalorder %s31, %s32
      %p43 = scmp.eq.s32.totalorder %s23, 0
      %p44 = por %p42, %p43
      %p45 = scmp.ne.s32.totalorder %s31, %s32
      %p46 = scmp.eq.s32.totalorder %s24, 1
      %p47 = por %p45, %p46
      %p49 = scmp.ne.s32.totalorder %s32, %s48
      %p50 = scmp.eq.s32.totalorder %s24, 0
      %p51 = por %p49, %p50
      %s53 = sadd.s32 %s52, 1
      %p56 = scmp.eq.s32.totalorder %s18, 1
      %p57 = scmp.ne.s32.totalorder %s52, %s54
      %p58 = scmp.eq.s32.totalorder %s18, 0
      %p59 = por %p57, %p58
      %p60 = scmp.ne.s32.totalorder %s52, %s54
      %p61 = scmp.eq.s32.totalorder %s23, 1
      %p62 = por %p60, %p61
      %p63 = scmp.ne.s32.totalorder %s54, %s55
      %p64 = scmp.eq.s32.totalorder %s23, 0
      %p65 = por %p63, %p64
      %p66 = scmp.ne.s32.totalorder %s54, %s55
      %p67 = scmp.eq.s32.totalorder %s24, 1
      %p68 = por %p66, %p67
      %p70 = scmp.ne.s32.totalorder %s55, %s69
      %p71 = scmp.eq.s32.totalorder %s24, 0
      %p72 = por %p70, %p71
      %s74 = sadd.s32 %s73, 1
      %p77 = scmp.eq.s32.totalorder %s18, 1
      %p78 = scmp.ne.s32.totalorder %s73, %s75
      %p79 = scmp.eq.s32.totalorder %s18, 0
      %p80 = por %p78, %p79
      %p81 = scmp.ne.s32.totalorder %s73, %s75
      %p82 = scmp.eq.s32.totalorder %s23, 1
      %p83 = por %p81, %p82
      %p84 = scmp.ne.s32.totalorder %s75, %s76
      %p85 = scmp.eq.s32.totalorder %s23, 0
      %p86 = por %p84, %p85
      %p87 = scmp.ne.s32.totalorder %s75, %s76
      %p88 = scmp.eq.s32.totalorder %s24, 1
      %p89 = por %p87, %p88
      %p91 = scmp.ne.s32.totalorder %s76, %s90
      %p92 = scmp.eq.s32.totalorder %s24, 0
      %p93 = por %p91, %p92
      %s95 = sadd.s32 %s94, 1
      %p98 = scmp.eq.s32.totalorder %s18, 1
      %p99 = scmp.ne.s32.totalorder %s94, %s96
      %p100 = scmp.eq.s32.totalorder %s18, 0
      %p101 = por %p99, %p100
      %p102 = scmp.ne.s32.totalorder %s94, %s96
      %p103 = scmp.eq.s32.totalorder %s23, 1
      %p104 = por %p102, %p103
      %p105 = scmp.ne.s32.totalorder %s96, %s97
      %p106 = scmp.eq.s32.totalorder %s23, 0
      %p107 = por %p105, %p106
      %p108 = scmp.ne.s32.totalorder %s96, %s97
      %p109 = scmp.eq.s32.totalorder %s24, 1
      %p110 = por %p108, %p109
      %p112 = scmp.ne.s32.totalorder %s97, %s111
      %p113 = scmp.eq.s32.totalorder %s24, 0
      %p114 = por %p112, %p113
      %s116 = sadd.s32 %s115, 1
      %p119 = scmp.eq.s32.totalorder %s18, 1
      %p120 = scmp.ne.s32.totalorder %s115, %s117
      %p121 = scmp.eq.s32.totalorder %s18, 0
      %p122 = por %p120, %p121
      %p123 = scmp.ne.s32.totalorder %s115, %s117
      %p124 = scmp.eq.s32.totalorder %s23, 1
      %p125 = por %p123, %p124
      %p126 = scmp.ne.s32.totalorder %s117, %s118
      %p127 = scmp.eq.s32.totalorder %s23, 0
      %p128 = por %p126, %p127
      %p129 = scmp.ne.s32.totalorder %s117, %s118
      %p130 = scmp.eq.s32.totalorder %s24, 1
      %p131 = por %p129, %p130
      %p133 = scmp.ne.s32.totalorder %s118, %s132
      %p134 = scmp.eq.s32.totalorder %s24, 0
      %p135 = por %p133, %p134
      %s136 = ssub.s32 %s18, %s25
      %p137 = scmp.eq.s32.totalorder %s136, 0
      %s139 = sadd.s32 %s138, 1
      %s140 = scalar_select %p137, %s138, %s139
      %p143 = pneg %p137
      %p144 = scmp.eq.s32.totalorder %s18, 1
      %p145 = por %p143, %p144
      %p146 = scmp.ne.s32.totalorder %s138, %s141
      %p147 = scmp.eq.s32.totalorder %s18, 0
      %p148 = por %p146, %p147
      %p149 = scmp.ne.s32.totalorder %s138, %s141
      %p150 = scmp.eq.s32.totalorder %s23, 1
      %p151 = por %p149, %p150
      %p152 = scmp.ne.s32.totalorder %s141, %s142
      %p153 = scmp.eq.s32.totalorder %s23, 0
      %p154 = por %p152, %p153
      %p155 = scmp.ne.s32.totalorder %s141, %s142
      %p156 = scmp.eq.s32.totalorder %s24, 1
      %p157 = por %p155, %p156
      %p159 = scmp.ne.s32.totalorder %s142, %s158
      %p160 = scmp.eq.s32.totalorder %s24, 0
      %p161 = por %p159, %p160
      %p162 = scmp.le.s32.totalorder 1, %s18
      %p163 = scmp.lt.s32.totalorder %s18, 3
      %p164 = pnand %p162, %p163
      %p165 = pneg %p164
      // Predicated region
      $region9: #{tpu_custom_call.1} parent=5 // pred_check
        _
      $region10: #{tpu_custom_call.1} parent=5 // pred_check_branch
        %167 = sbr.rel (%p164) target = $region12
      $region11: #{tpu_custom_call.1} parent=5 // pred_region
        %s168 = ssub.s32 %s18, 1
        // Predicated region
        $region13: #{tpu_custom_call.1} parent=11 // pred_check
          %p169 = pneg %p65
        $region14: #{tpu_custom_call.1} parent=11 // pred_check_branch
          %171 = sbr.rel (%p169) target = $region16
        $region15: #{tpu_custom_call.1} parent=11 // pred_region
          %s173 = ssub.s32 1024, 1024
          %174 = vsyncadd [#allocation6], %s173
          %s175 = sshll.u32 [#allocation5], 4
          %s176 = int_to_ptr.vmem [resolvable:$true] %s175
          %181 = dma.hbm_to_vmem [thread:$0]  %s1, 1024, %s176, [#allocation6], 128, 128, 8
        $region16: #{tpu_custom_call.1} parent=11 // pred_fallthru
          _
        // Predicated region
        $region17: #{tpu_custom_call.1} parent=11 // pred_check
          %p182 = pneg %p86
        $region18: #{tpu_custom_call.1} parent=11 // pred_check_branch
          %184 = sbr.rel (%p182) target = $region20
        $region19: #{tpu_custom_call.1} parent=11 // pred_region
          _
        $region20: #{tpu_custom_call.1} parent=11 // pred_fallthru
          _
        // Predicated region
        $region21: #{tpu_custom_call.1} parent=11 // pred_check
          %p185 = pneg %p107
        $region22: #{tpu_custom_call.1} parent=11 // pred_check_branch
          %187 = sbr.rel (%p185) target = $region24
        $region23: #{tpu_custom_call.1} parent=11 // pred_region
          %s189 = ssub.s32 1024, 1024
          %190 = vsyncadd [#allocation6], %s189
          %s191 = sshll.u32 [#allocation7], 4
          %s192 = int_to_ptr.vmem [resolvable:$true] %s191
          %197 = dma.hbm_to_vmem [thread:$0]  %s3, 1024, %s192, [#allocation6], 64, 64, 4
        $region24: #{tpu_custom_call.1} parent=11 // pred_fallthru
          _
        // Predicated region
        $region25: #{tpu_custom_call.1} parent=11 // pred_check
          %p198 = pneg %p128
        $region26: #{tpu_custom_call.1} parent=11 // pred_check_branch
          %200 = sbr.rel (%p198) target = $region28
        $region27: #{tpu_custom_call.1} parent=11 // pred_region
          _
        $region28: #{tpu_custom_call.1} parent=11 // pred_fallthru
          _
      $region12: #{tpu_custom_call.1} parent=5 // pred_fallthru
        _
      %p201 = scmp.lt.s32.totalorder %s18, 2
      // Predicated region
      $region29: #{tpu_custom_call.1} parent=5 // pred_check
        %p202 = pneg %p201
      $region30: #{tpu_custom_call.1} parent=5 // pred_check_branch
        %204 = sbr.rel (%p202) target = $region32
      $region31: #{tpu_custom_call.1} parent=5 // pred_region
        // Predicated region
        $region33: #{tpu_custom_call.1} parent=31 // pred_check
          %p205 = pneg %p38
        $region34: #{tpu_custom_call.1} parent=31 // pred_check_branch
          %207 = sbr.rel (%p205) target = $region36
        $region35: #{tpu_custom_call.1} parent=31 // pred_region
          %s208 = sand.u32 %s28, 1
          %s209 = scalar_lea.sflag [#allocation3], %s208
          %s210 = sand.u32 %s28, 1
          %s211 = smul.addr %s210, 16
          %s212 = scalar_lea.vmem [#allocation2], %s211
          %s213 = smul.u32 2, %s18
          %s215 = ssub.s32 256, 256
          %216 = vsyncadd %s209, %s215
          %s217 = smul.addr %s213, 128
          %s218 = scalar_lea.hbm %s0, %s217
          %s219 = sshll.u32 %s212, 4
          %s220 = int_to_ptr.vmem [resolvable:$true] %s219
          %225 = dma.hbm_to_vmem [thread:$0]  %s218, 256, %s220, %s209, 128, 128, 8
        $region36: #{tpu_custom_call.1} parent=31 // pred_fallthru
          _
      $region32: #{tpu_custom_call.1} parent=5 // pred_fallthru
        _
      %p226 = scmp.le.s32.totalorder 1, %s18
      %p227 = scmp.lt.s32.totalorder %s18, 3
      %p228 = pnand %p226, %p227
      %p229 = pneg %p228
      // Predicated region
      $region37: #{tpu_custom_call.1} parent=5 // pred_check
        _
      $region38: #{tpu_custom_call.1} parent=5 // pred_check_branch
        %231 = sbr.rel (%p228) target = $region40
      $region39: #{tpu_custom_call.1} parent=5 // pred_region
        %s232 = ssub.s32 %s18, 1
        %s233 = sand.u32 %s31, 1
        %s234 = scalar_lea.sflag [#allocation3], %s233
        %s235 = sand.u32 %s31, 1
        %s236 = smul.addr %s235, 16
        %s237 = scalar_lea.vmem [#allocation2], %s236
        // Predicated region
        $region41: #{tpu_custom_call.1} parent=39 // pred_check
          %p238 = pneg %p44
        $region42: #{tpu_custom_call.1} parent=39 // pred_check_branch
          %240 = sbr.rel (%p238) target = $region44
        $region43: #{tpu_custom_call.1} parent=39 // pred_region
          %241 = dma.done %s234, 256
        $region44: #{tpu_custom_call.1} parent=39 // pred_fallthru
          _
        // Predicated region
        $region45: #{tpu_custom_call.1} parent=39 // pred_check
          %p242 = pneg %p65
        $region46: #{tpu_custom_call.1} parent=39 // pred_check_branch
          %244 = sbr.rel (%p242) target = $region48
        $region47: #{tpu_custom_call.1} parent=39 // pred_region
          %245 = dma.done [#allocation6], 1024
        $region48: #{tpu_custom_call.1} parent=39 // pred_fallthru
          _
        // Predicated region
        $region49: #{tpu_custom_call.1} parent=39 // pred_check
          %p246 = pneg %p107
        $region50: #{tpu_custom_call.1} parent=39 // pred_check_branch
          %248 = sbr.rel (%p246) target = $region52
        $region51: #{tpu_custom_call.1} parent=39 // pred_region
          %249 = dma.done [#allocation6], 1024
        $region52: #{tpu_custom_call.1} parent=39 // pred_fallthru
          _
        %s250 = sand.u32 %s31, 1
        %s251 = scalar_lea.sflag [#allocation3], %s250
        %s252 = sand.u32 %s31, 1
        %s253 = smul.addr %s252, 16
        %s254 = scalar_lea.vmem [#allocation2], %s253
        %p255 = pneg %p44
        %p256 = pneg %p41
        %p257 = pneg %p65
        %p258 = pneg %p62
        %p259 = pneg %p86
        %p260 = pneg %p83
        %p261 = pneg %p107
        %p262 = pneg %p104
        %p263 = pneg %p128
        %p264 = pneg %p125
        %p265 = pneg %p154
        %p266 = pneg %p151
        %s267 = sand.u32 %s141, 1
        %s268 = scalar_lea.sflag [#allocation4], %s267
        %s269 = sand.u32 %s141, 1
        %s270 = smul.addr %s269, 16
        %s271 = scalar_lea.vmem [#allocation8], %s270
        %s272 = smul.u32 2, %s23
        %s273 = smul.u32 2, %s23
        %v275 = vld [vmem:[%s237] sm:$0xff]
        %v276 = vld [vmem:[%s237 + $0x8] sm:$0xff]
        %v277 = vpack.c.bf16 %v276, %v275
        %v278 = vld [vmem:[#allocation5] sm:$0xff]
        %v279 = vld [vmem:[#allocation5 + $0x8] sm:$0xff]
        %v280 = vld [vmem:[#allocation5 + $0x10] sm:$0xff]
        %v281 = vld [vmem:[#allocation5 + $0x18] sm:$0xff]
        %v282 = vld [vmem:[#allocation5 + $0x20] sm:$0xff]
        %v283 = vld [vmem:[#allocation5 + $0x28] sm:$0xff]
        %v284 = vld [vmem:[#allocation5 + $0x30] sm:$0xff]
        %v285 = vld [vmem:[#allocation5 + $0x38] sm:$0xff]
        %v286 = vld [vmem:[%s2] sm:$0x3]
        %v288 = vlaneseq
        %v289 = vshrl.u32 %v288, 7
        %v290 = vsub.s32 0, %v289
        %v291 = vrot.slane %v286, %v290
        %v292 = vlaneseq
        %v293 = vshrl.u32 %v292, 7
        %v294 = vsub.s32 1, %v293
        %v295 = vrot.slane %v286, %v294
        %v306 = vunpack.c.l.b16 %v278
        %v307 = vunpack.c.h.b16 %v278
        %v308 = vunpack.c.l.b16 %v279
        %v309 = vunpack.c.h.b16 %v279
        %v310 = vunpack.c.l.b16 %v280
        %v311 = vunpack.c.h.b16 %v280
        %v312 = vunpack.c.l.b16 %v281
        %v313 = vunpack.c.h.b16 %v281
        %v314 = vunpack.c.l.b16 %v282
        %v315 = vunpack.c.h.b16 %v282
        %v316 = vunpack.c.l.b16 %v283
        %v317 = vunpack.c.h.b16 %v283
        %v318 = vunpack.c.l.b16 %v284
        %v319 = vunpack.c.h.b16 %v284
        %v320 = vunpack.c.l.b16 %v285
        %v321 = vunpack.c.h.b16 %v285
        %v322 = vpack.c.b16 %v308, %v306
        %v323 = vpack.c.b16 %v309, %v307
        %v324 = vpack.c.b16 %v312, %v310
        %v325 = vpack.c.b16 %v313, %v311
        %v326 = vpack.c.b16 %v316, %v314
        %v327 = vpack.c.b16 %v317, %v315
        %v328 = vpack.c.b16 %v320, %v318
        %v329 = vpack.c.b16 %v321, %v319
        %vm338 = vcmask 523264
        %v340 = vsel %vm338, %v277, 0
        %342 = vmatprep.subr.bf16.mxu0 %v323
        %343 = vmatpush1.bf16.msra.mxu0 %v322
        %344 = vmatprep.subr.bf16.mxu0 %v325
        %345 = vmatpush1.bf16.msra.mxu0 %v324
        %346 = vmatprep.subr.bf16.mxu0 %v327
        %347 = vmatpush1.bf16.msra.mxu0 %v326
        %348 = vmatprep.subr.bf16.mxu0 %v329
        %349 = vmatpush1.bf16.msra.mxu0 %v328
        %350 = vmatprep.subr.bf16.mxu0 0
        %351 = vmatpush1.bf16.msra.mxu0 0
        %352 = vmatprep.subr.bf16.mxu0 0
        %353 = vmatpush1.bf16.msra.mxu0 0
        %354 = vmatprep.subr.bf16.mxu0 0
        %355 = vmatpush1.bf16.msra.mxu0 0
        %356 = vmatprep.subr.bf16.mxu0 0
        %357 = vmatpush1.bf16.msra.mxu0 0
        %358 = vmatprep.subr.bf16.mxu0 0
        %359 = vmatpush1.bf16.msra.mxu0 0
        %360 = vmatprep.subr.bf16.mxu0 0
        %361 = vmatpush1.bf16.msra.mxu0 0
        %362 = vmatprep.subr.bf16.mxu0 0
        %363 = vmatpush1.bf16.msra.mxu0 0
        %364 = vmatprep.subr.bf16.mxu0 0
        %365 = vmatpush1.bf16.msra.mxu0 0
        %366 = vmatprep.subr.bf16.mxu0 0
        %367 = vmatpush1.bf16.msra.mxu0 0
        %368 = vmatprep.subr.bf16.mxu0 0
        %369 = vmatpush1.bf16.msra.mxu0 0
        %370 = vmatprep.subr.bf16.mxu0 0
        %371 = vmatpush1.bf16.msra.mxu0 0
        %372 = vmatprep.subr.bf16.mxu0 0
        %373 = vmatpush1.bf16.msra.mxu0 0
        %374 = vmatprep.mubr.bf16.mxu0 0
        %375 = vmatmul.mubr.bf16.gmra.mrb[0].mxu0 %v340
        %v376 = vpop.f32.mrb[0].mxu0
        %v377 = vadd.f32 %v291, %v376
        %v378 = vpop.f32.mrb[0].mxu0
        %v379 = vadd.f32 %v295, %v378
        %v380 = vpop.f32.mrb[0].mxu0
        %v381 = vadd.f32 %v291, %v380
        %v382 = vpop.f32.mrb[0].mxu0
        %v383 = vadd.f32 %v295, %v382
        %384 = vdwg.mxu0
        %v385 = vmax.f32 %v377, 0.0
        %v386 = vmax.f32 %v379, 0.0
        %v387 = vmax.f32 %v381, 0.0
        %v388 = vmax.f32 %v383, 0.0
        %v389 = vpack.c.bf16 %v387, %v385
        %v390 = vld [vmem:[#allocation7] sm:$0xf]
        %v391 = vld [vmem:[#allocation7 + $0x4] sm:$0xf]
        %v392 = vld [vmem:[#allocation7 + $0x8] sm:$0xf]
        %v393 = vld [vmem:[#allocation7 + $0xc] sm:$0xf]
        %v394 = vld [vmem:[#allocation7 + $0x10] sm:$0xf]
        %v395 = vld [vmem:[#allocation7 + $0x14] sm:$0xf]
        %v396 = vld [vmem:[#allocation7 + $0x18] sm:$0xf]
        %v397 = vld [vmem:[#allocation7 + $0x1c] sm:$0xf]
        %v398 = vld [vmem:[#allocation7 + $0x20] sm:$0xf]
        %v399 = vld [vmem:[#allocation7 + $0x24] sm:$0xf]
        %v400 = vld [vmem:[#allocation7 + $0x28] sm:$0xf]
        %v401 = vld [vmem:[#allocation7 + $0x2c] sm:$0xf]
        %v402 = vld [vmem:[#allocation7 + $0x30] sm:$0xf]
        %v403 = vld [vmem:[#allocation7 + $0x34] sm:$0xf]
        %v404 = vld [vmem:[#allocation7 + $0x38] sm:$0xf]
        %v405 = vld [vmem:[#allocation7 + $0x3c] sm:$0xf]
        %v406 = vld [vmem:[%s4] sm:$0x1]
        %v408 = vlaneseq
        %v409 = vshrl.u32 %v408, 7
        %v410 = vsub.s32 0, %v409
        %v411 = vrot.slane %v406, %v410
        %v429 = vunpack.c.l.b16 %v390
        %v430 = vunpack.c.l.b16 %v391
        %v431 = vunpack.c.l.b16 %v392
        %v432 = vunpack.c.l.b16 %v393
        %v433 = vunpack.c.l.b16 %v394
        %v434 = vunpack.c.l.b16 %v395
        %v435 = vunpack.c.l.b16 %v396
        %v436 = vunpack.c.l.b16 %v397
        %v437 = vunpack.c.l.b16 %v398
        %v438 = vunpack.c.l.b16 %v399
        %v439 = vunpack.c.l.b16 %v400
        %v440 = vunpack.c.l.b16 %v401
        %v441 = vunpack.c.l.b16 %v402
        %v442 = vunpack.c.l.b16 %v403
        %v443 = vunpack.c.l.b16 %v404
        %v444 = vunpack.c.l.b16 %v405
        %v445 = vpack.c.b16 %v430, %v429
        %v446 = vpack.c.b16 %v432, %v431
        %v447 = vpack.c.b16 %v434, %v433
        %v448 = vpack.c.b16 %v436, %v435
        %v449 = vpack.c.b16 %v438, %v437
        %v450 = vpack.c.b16 %v440, %v439
        %v451 = vpack.c.b16 %v442, %v441
        %v452 = vpack.c.b16 %v444, %v443
        %461 = vmatprep.subr.bf16.mxu0 0
        %462 = vmatpush1.bf16.msra.mxu0 %v445
        %463 = vmatprep.subr.bf16.mxu0 0
        %464 = vmatpush1.bf16.msra.mxu0 %v446
        %465 = vmatprep.subr.bf16.mxu0 0
        %466 = vmatpush1.bf16.msra.mxu0 %v447
        %467 = vmatprep.subr.bf16.mxu0 0
        %468 = vmatpush1.bf16.msra.mxu0 %v448
        %469 = vmatprep.subr.bf16.mxu0 0
        %470 = vmatpush1.bf16.msra.mxu0 %v449
        %471 = vmatprep.subr.bf16.mxu0 0
        %472 = vmatpush1.bf16.msra.mxu0 %v450
        %473 = vmatprep.subr.bf16.mxu0 0
        %474 = vmatpush1.bf16.msra.mxu0 %v451
        %475 = vmatprep.subr.bf16.mxu0 0
        %476 = vmatpush1.bf16.msra.mxu0 %v452
        %477 = vmatprep.subr.bf16.mxu0 0
        %478 = vmatpush1.bf16.msra.mxu0 0
        %479 = vmatprep.subr.bf16.mxu0 0
        %480 = vmatpush1.bf16.msra.mxu0 0
        %481 = vmatprep.subr.bf16.mxu0 0
        %482 = vmatpush1.bf16.msra.mxu0 0
        %483 = vmatprep.subr.bf16.mxu0 0
        %484 = vmatpush1.bf16.msra.mxu0 0
        %485 = vmatprep.subr.bf16.mxu0 0
        %486 = vmatpush1.bf16.msra.mxu0 0
        %487 = vmatprep.subr.bf16.mxu0 0
        %488 = vmatpush1.bf16.msra.mxu0 0
        %489 = vmatprep.subr.bf16.mxu0 0
        %490 = vmatpush1.bf16.msra.mxu0 0
        %491 = vmatprep.subr.bf16.mxu0 0
        %492 = vmatpush1.bf16.msra.mxu0 0
        %493 = vmatprep.mubr.bf16.mxu0 0
        %494 = vmatmul.mubr.bf16.gmra.mrb[0].mxu0 %v389
        %v495 = vpop.f32.mrb[0].mxu0
        %v496 = vadd.f32 %v411, %v495
        %v497 = vpop.f32.mrb[0].mxu0
        %v498 = vpop.f32.mrb[0].mxu0
        %v499 = vadd.f32 %v411, %v498
        %v500 = vpop.f32.mrb[0].mxu0
        %501 = vdwg.mxu0
        %v502 = vmax.f32 %v496, 0.0
        %v503 = vmax.f32 %v499, 0.0
        %v504 = vadd.f32 %v502, %v386
        %v505 = vadd.f32 %v503, %v388
        %506 = vst [vmem:[%s271] sm:$0xff] %v504
        %507 = vst [vmem:[%s271 + $0x8] sm:$0xff] %v505
        %s508 = sand.u32 %s141, 1
        %s509 = scalar_lea.sflag [#allocation4], %s508
        %s510 = sand.u32 %s141, 1
        %s511 = smul.addr %s510, 16
        %s512 = scalar_lea.vmem [#allocation8], %s511
        // Predicated region
        $region53: #{tpu_custom_call.1} parent=39 // pred_check
          %p513 = pneg %p151
        $region54: #{tpu_custom_call.1} parent=39 // pred_check_branch
          %515 = sbr.rel (%p513) target = $region56
        $region55: #{tpu_custom_call.1} parent=39 // pred_region
          %s516 = smul.u32 2, %s23
          %s518 = ssub.s32 256, 256
          %519 = vsyncadd %s509, %s518
          %s520 = smul.addr %s516, 128
          %s521 = scalar_lea.hbm %s5, %s520
          %s522 = sshll.u32 %s512, 4
          %s523 = int_to_ptr.vmem [resolvable:$true] %s522
          %528 = dma.vmem_to_hbm [thread:$0]  %s523, 256, %s521, %s509, 128, 128, 8
        $region56: #{tpu_custom_call.1} parent=39 // pred_fallthru
          _
      $region40: #{tpu_custom_call.1} parent=5 // pred_fallthru
        _
      %p529 = scmp.le.s32.totalorder 2, %s18
      // Predicated region
      $region57: #{tpu_custom_call.1} parent=5 // pred_check
        %p530 = pneg %p529
      $region58: #{tpu_custom_call.1} parent=5 // pred_check_branch
        %532 = sbr.rel (%p530) target = $region60
      $region59: #{tpu_custom_call.1} parent=5 // pred_region
        %s533 = ssub.s32 %s18, 2
        // Predicated region
        $region61: #{tpu_custom_call.1} parent=59 // pred_check
          %p534 = pneg %p157
        $region62: #{tpu_custom_call.1} parent=59 // pred_check_branch
          %536 = sbr.rel (%p534) target = $region64
        $region63: #{tpu_custom_call.1} parent=59 // pred_region
          %s537 = sand.u32 %s142, 1
          %s538 = scalar_lea.sflag [#allocation4], %s537
          %s539 = sand.u32 %s142, 1
          %s540 = smul.addr %s539, 16
          %s541 = scalar_lea.vmem [#allocation8], %s540
          %542 = dma.done %s538, 256
        $region64: #{tpu_custom_call.1} parent=59 // pred_fallthru
          _
      $region60: #{tpu_custom_call.1} parent=5 // pred_fallthru
        _
    $region6: #{tpu_custom_call.1} parent=1 // loop_footer
      %s22 = sadd.s32 1, %s18
    $region7: #{tpu_custom_call.1} parent=1 // loop_footer_branch
      %17 = sbr.rel target = $region3
    $region8: #{tpu_custom_call.1} parent=1 // loop_exit
      _
    %543 = vsyncpa [#allocation3], 1
    %s544 = scalar_lea.sflag [#allocation3], 1
    %545 = vsyncpa %s544, 1
    %546 = vsyncpa [#allocation6], 1
    %547 = vsyncpa [#allocation4], 1
    %s548 = scalar_lea.sflag [#allocation4], 1
    %549 = vsyncpa %s548, 1

</llo_original>
